<compile_context>
chip_gen: v5e
topology: v5e:2x2
jax: 0.10.0
libtpu: 0.0.40
codegen_flags: <defaults>
</compile_context>

<pallas_src>
import jax
import jax.numpy as jnp
from jax import lax
from jax.experimental import pallas as pl
from jax.experimental.pallas import tpu as pltpu


def linear_kernel(x_ref, w_ref, b_ref, o_ref):
    # x_ref: [TB, D], w_ref: [C, D], b_ref: [1, C], o_ref: [TB, C]
    x = x_ref[...]
    w = w_ref[...]
    # Contract D (axis 1 of both operands) -> [TB, C]; no .T / relayout needed.
    acc = lax.dot_general(
        x, w,
        dimension_numbers=(((1,), (1,)), ((), ())),
        preferred_element_type=jnp.float32,
    )
    acc = acc + b_ref[...].astype(jnp.float32)   # broadcast bias over batch rows
    o_ref[...] = acc.astype(o_ref.dtype)


def simple_classifier_forward(x, weight, bias, *, block_b=512):
    """y = x @ weight.T + bias, matching torch.nn.Linear semantics.

    The batch axis is tiled with tile size `block_b` (capped by B); the weight
    and bias use constant index_maps so they are loaded into VMEM once and stay
    resident while activation tiles stream through double-buffered.
    NOTE: keep block_b modest (<=512 here) so double-buffered tiles fit the
    32 MiB scoped-VMEM default on v7x; on v5e/v6e it can be swept higher.
    """
    B, D = x.shape
    C, D_w = weight.shape
    assert D == D_w, "weight must be [num_classes, input_dim]"
    bias2d = bias.reshape(1, C)

    # Pick a batch tile: whole batch if it is small, otherwise block_b rows
    # (a multiple of 8, satisfying the sublane constraint), padding B up so
    # the grid divides evenly.
    if B <= block_b:
        tb = B
        b_pad = B
    else:
        tb = block_b
        b_pad = ((B + tb - 1) // tb) * tb

    x_p = x if b_pad == B else jnp.pad(x, ((0, b_pad - B), (0, 0)))
    grid = (b_pad // tb,)

    itemsize = jnp.dtype(x.dtype).itemsize
    cost = pl.CostEstimate(
        flops=2 * b_pad * D * C,
        transcendentals=0,
        bytes_accessed=(b_pad * D + C * D + C + b_pad * C) * itemsize,
    )

    out = pl.pallas_call(
        linear_kernel,
        out_shape=jax.ShapeDtypeStruct((b_pad, C), x.dtype),
        grid=grid,
        in_specs=[
            pl.BlockSpec((tb, D), lambda i: (i, 0)),   # streamed activations
            pl.BlockSpec((C, D), lambda i: (0, 0)),    # weight: VMEM-resident
            pl.BlockSpec((1, C), lambda i: (0, 0)),    # bias:   VMEM-resident
        ],
        out_specs=pl.BlockSpec((tb, C), lambda i: (i, 0)),
        compiler_params=pltpu.CompilerParams(
            dimension_semantics=("parallel",),          # shard batch across TCs (v7x)
        ),
        cost_estimate=cost,
    )(x_p, weight, bias2d)

    return out if b_pad == B else out[:B]


def init_params(key, input_dim, num_classes, dtype=jnp.float32):
    """Deterministic init mimicking torch.nn.Linear defaults (uniform +/- 1/sqrt(fan_in))."""
    k_w, k_b = jax.random.split(key)
    bound = 1.0 / jnp.sqrt(jnp.asarray(input_dim, dtype=jnp.float32))
    weight = jax.random.uniform(
        k_w, (num_classes, input_dim), dtype=dtype, minval=-bound, maxval=bound
    )
    bias = jax.random.uniform(
        k_b, (num_classes,), dtype=dtype, minval=-bound, maxval=bound
    )
    return weight, bias


if __name__ == "__main__":
    key = jax.random.PRNGKey(0)
    k_x, k_p, k_x2 = jax.random.split(key, 3)

    # Small shapes matching the module spec.
    batch = 8
    input_dim = 32
    num_classes = 16

    x = jax.random.normal(k_x, (batch, input_dim), dtype=jnp.float32)
    weight, bias = init_params(k_p, input_dim, num_classes)

    y = simple_classifier_forward(x, weight, bias)
    jax.block_until_ready(y)

    y_ref = x @ weight.T + bias
    assert y.shape == (batch, num_classes)
    assert jnp.allclose(y, y_ref, atol=1e-5, rtol=1e-5)

    # Exercise the batch-tiled (multi-grid-step) path as well.
    big_batch = 1024
    x_big = jax.random.normal(k_x2, (big_batch, input_dim), dtype=jnp.float32)
    y_big = simple_classifier_forward(x_big, weight, bias, block_b=256)
    jax.block_until_ready(y_big)
    y_big_ref = x_big @ weight.T + bias
    assert y_big.shape == (big_batch, num_classes)
    assert jnp.allclose(y_big, y_big_ref, atol=1e-5, rtol=1e-5)

    print("KERNEL_OK")
</pallas_src>

<mosaic_0001>
module attributes {stable_mosaic.version = 11 : i64} {
  func.func @linear_kernel(%arg0: i32, %arg1: memref<8x32xf32, #tpu.memory_space<vmem>>, %arg2: memref<16x32xf32, #tpu.memory_space<vmem>>, %arg3: memref<1x16xf32, #tpu.memory_space<vmem>>, %arg4: memref<8x16xf32, #tpu.memory_space<vmem>>) attributes {dimension_semantics = [#tpu.dimension_semantics<parallel>], iteration_bounds = array<i64: 1>, scalar_prefetch = 0 : i64, scratch_operands = 0 : i64, tpu.core_type = #tpu.core_type<tc>, window_params = [{transform_indices = @transform_0, window_bounds = array<i64: 8, 32>}, {pipeline_mode = #tpu.pipeline_mode<synchronous>, transform_indices = @transform_1, window_bounds = array<i64: 16, 32>}, {pipeline_mode = #tpu.pipeline_mode<synchronous>, transform_indices = @transform_2, window_bounds = array<i64: 1, 16>}, {transform_indices = @transform_3, window_bounds = array<i64: 8, 16>}]} {
    %c0 = arith.constant 0 : index
    %c0_0 = arith.constant 0 : index
    %0 = vector.load %arg1[%c0, %c0_0] : memref<8x32xf32, #tpu.memory_space<vmem>>, vector<8x32xf32>
    %c0_1 = arith.constant 0 : index
    %c0_2 = arith.constant 0 : index
    %1 = vector.load %arg2[%c0_1, %c0_2] : memref<16x32xf32, #tpu.memory_space<vmem>>, vector<16x32xf32>
    %cst = arith.constant dense<0.000000e+00> : vector<8x16xf32>
    %2 = tpu.matmul %0, %1, %cst {dimension_numbers = #tpu.dot_dimension_numbers<[1], [1], [0], [0], [0, 0, 1, 0], [], []>} : vector<8x32xf32>, vector<16x32xf32>, vector<8x16xf32> -> vector<8x16xf32>
    %c0_3 = arith.constant 0 : index
    %c0_4 = arith.constant 0 : index
    %3 = vector.load %arg3[%c0_3, %c0_4] : memref<1x16xf32, #tpu.memory_space<vmem>>, vector<1x16xf32>
    %4 = vector.broadcast %3 : vector<1x16xf32> to vector<8x16xf32>
    %5 = arith.addf %2, %4 : vector<8x16xf32>
    %c0_5 = arith.constant 0 : index
    %c0_6 = arith.constant 0 : index
    %6 = vector.load %arg4[%c0_5, %c0_6] : memref<8x16xf32, #tpu.memory_space<vmem>>, vector<8x16xf32>
    tpu.vector_store %arg4[%c0_5, %c0_6], %5 {strides = array<i32>} : memref<8x16xf32, #tpu.memory_space<vmem>>, vector<8x16xf32>,
    return
  }
  func.func @transform_0(%arg0: i32) -> (i32, i32) {
    %c0_i32 = arith.constant 0 : i32
    %c0_i32_0 = arith.constant 0 : i32
    return %arg0, %c0_i32 : i32, i32
  }
  func.func @transform_1(%arg0: i32) -> (i32, i32) {
    %c0_i32 = arith.constant 0 : i32
    %c0_i32_0 = arith.constant 0 : i32
    %c0_i32_1 = arith.constant 0 : i32
    return %c0_i32, %c0_i32_0 : i32, i32
  }
  func.func @transform_2(%arg0: i32) -> (i32, i32) {
    %c0_i32 = arith.constant 0 : i32
    %c0_i32_0 = arith.constant 0 : i32
    %c0_i32_1 = arith.constant 0 : i32
    return %c0_i32, %c0_i32_0 : i32, i32
  }
  func.func @transform_3(%arg0: i32) -> (i32, i32) {
    %c0_i32 = arith.constant 0 : i32
    %c0_i32_0 = arith.constant 0 : i32
    return %arg0, %c0_i32 : i32, i32
  }
}

</mosaic_0001>

<llo_original>
// kernel: tpu_custom_call.1
$region0: #{tpu_custom_call.1}
  #allocation0 [shape = 'u32[]', space=smem, size = 0x4, offset = 0x4, fixed_abs, tag = 'smem constant byte address 0x4 - core index']
  #allocation1 [shape = 'u32[72,128]{1,0:T(1,128)}', space=vmem, size = 0x9000, scoped, tag = 'internal scratch']
  %s0 = inlined_call_operand.hbm [shape: f32[8,32], index: 0, kind: input, shape index: {}]
  %s1 = inlined_call_operand.hbm [shape: f32[16,32], index: 1, kind: input, shape index: {}]
  %s2 = inlined_call_operand.vmem [shape: f32[1,16], index: 2, kind: input, shape index: {}]
  %s3 = inlined_call_operand.hbm [shape: f32[8,16], index: 3, kind: output, shape index: {}]
  %s4 = sld [smem:[#allocation0]]
  $region30: #{tpu_custom_call.1} parent=0
    _
  %s6 = ssub.s32 1, %s4
  %s7 = scalar_select 0, %s6, %s4
  $region1: #{tpu_custom_call.1} parent=0
    #allocation2 [shape = 'u8[4096]{0}', space=vmem, size = 0x1000, scoped, tag = 'input window, operand 0, single buffered']
    #allocation3 [shape = 's32[1]{0}', space=sflag, size = 0x4, scoped, tag = 'scoped memory for tpu_custom_call.1']
    #allocation4 [shape = 's32[1]{0}', space=sflag, size = 0x4, scoped, tag = 'scoped memory for tpu_custom_call.1']
    #allocation5 [shape = 'u8[8192]{0}', space=vmem, size = 0x2000, scoped, tag = 'input window, operand 1, single buffered']
    #allocation6 [shape = 's32[1]{0}', space=sflag, size = 0x4, scoped, tag = 'scoped memory for tpu_custom_call.1']
    #allocation7 [shape = 'u8[4096]{0}', space=vmem, size = 0x1000, scoped, tag = 'output window, operand 0, single buffered']
    %8 = vsyncpa [#allocation3], 0
    %9 = vsyncpa [#allocation6], 0
    %10 = vsyncpa [#allocation4], 0
    // Predicated region
    $region2: #{tpu_custom_call.1} parent=1 // pred_check
      _
    $region3: #{tpu_custom_call.1} parent=1 // pred_check_branch
      %12 = sbr.rel (0) target = $region5
    $region4: #{tpu_custom_call.1} parent=1 // pred_region
      %14 = vsyncadd [#allocation3], 0
      %s16 = sshll.u32 %s0, 4
      %s17 = int_to_ptr.hbm [resolvable:$true] %s16
      %s18 = sshll.u32 [#allocation2], 4
      %s19 = int_to_ptr.vmem [resolvable:$true] %s18
      %21 = dma.hbm_to_vmem [thread:$0]  %s17, 128, %s19, [#allocation3]
    $region5: #{tpu_custom_call.1} parent=1 // pred_fallthru
      _
    // Predicated region
    $region6: #{tpu_custom_call.1} parent=1 // pred_check
      _
    $region7: #{tpu_custom_call.1} parent=1 // pred_check_branch
      %23 = sbr.rel (0) target = $region9
    $region8: #{tpu_custom_call.1} parent=1 // pred_region
      %25 = vsyncadd [#allocation6], 0
      %s26 = sshll.u32 %s1, 4
      %s27 = int_to_ptr.hbm [resolvable:$true] %s26
      %s28 = sshll.u32 [#allocation5], 4
      %s29 = int_to_ptr.vmem [resolvable:$true] %s28
      %34 = dma.hbm_to_vmem [thread:$0]  %s27, 256, %s29, [#allocation6], 128, 128, 8
    $region9: #{tpu_custom_call.1} parent=1 // pred_fallthru
      _
    // Predicated region
    $region10: #{tpu_custom_call.1} parent=1 // pred_check
      _
    $region11: #{tpu_custom_call.1} parent=1 // pred_check_branch
      %36 = sbr.rel (0) target = $region13
    $region12: #{tpu_custom_call.1} parent=1 // pred_region
      _
    $region13: #{tpu_custom_call.1} parent=1 // pred_fallthru
      _
    // Predicated region
    $region14: #{tpu_custom_call.1} parent=1 // pred_check
      _
    $region15: #{tpu_custom_call.1} parent=1 // pred_check_branch
      %38 = sbr.rel (0) target = $region17
    $region16: #{tpu_custom_call.1} parent=1 // pred_region
      %40 = dma.done [#allocation3], 128
    $region17: #{tpu_custom_call.1} parent=1 // pred_fallthru
      _
    // Predicated region
    $region18: #{tpu_custom_call.1} parent=1 // pred_check
      _
    $region19: #{tpu_custom_call.1} parent=1 // pred_check_branch
      %42 = sbr.rel (0) target = $region21
    $region20: #{tpu_custom_call.1} parent=1 // pred_region
      %44 = dma.done [#allocation6], 256
    $region21: #{tpu_custom_call.1} parent=1 // pred_fallthru
      _
    %v45 = vld [vmem:[#allocation2] sm:$0xff]
    %v46 = vld [vmem:[#allocation5] sm:$0xff]
    %v47 = vld [vmem:[#allocation5 + $0x8] sm:$0xff]
    %v48 = vld [vmem:[%s2] sm:$0x1]
    %v50 = vperm.slane %v48, 0
    %vm52 = vcmask 261120
    %v54 = vsel %vm52, %v45, 0
    %v57 = vsel %vm52, %v46, 0
    %v60 = vsel %vm52, %v47, 0
    %62 = vmatpush.xpose.msra.mxu0 0.0
    %63 = vmatpush.xpose.msra.mxu0 0.0
    %64 = vmatpush.xpose.msra.mxu0 0.0
    %65 = vmatpush.xpose.msra.mxu0 0.0
    %66 = vmatpush.xpose.msra.mxu0 0.0
    %67 = vmatpush.xpose.msra.mxu0 0.0
    %68 = vmatpush.xpose.msra.mxu0 0.0
    %69 = vmatpush.xpose.msra.mxu0 0.0
    %70 = vmatpush.xpose.msra.mxu0 0.0
    %71 = vmatpush.xpose.msra.mxu0 0.0
    %72 = vmatpush.xpose.msra.mxu0 0.0
    %73 = vmatpush.xpose.msra.mxu0 0.0
    %74 = vmatpush.xpose.msra.mxu0 0.0
    %75 = vmatpush.xpose.msra.mxu0 0.0
    %76 = vmatpush.xpose.msra.mxu0 %v60
    %77 = vmatpush.xpose.msra.mxu0 %v57
    %78 = vmatmul.f32.gmra.mxu0 %v54
    %v79 = vpop.f32.mrf.mxu0
    %v80 = vadd.f32 %v50, %v79
    %81 = vdwg.mxu0
    %vm82 = vcmask 130048
    %83 = vst.msk [vmem:[#allocation7] sm:$0xff] %vm82, %v80
    // Predicated region
    $region22: #{tpu_custom_call.1} parent=1 // pred_check
      _
    $region23: #{tpu_custom_call.1} parent=1 // pred_check_branch
      %85 = sbr.rel (0) target = $region25
    $region24: #{tpu_custom_call.1} parent=1 // pred_region
      %87 = vsyncadd [#allocation4], 0
      %s89 = sshll.u32 [#allocation7], 4
      %s90 = int_to_ptr.vmem [resolvable:$true] %s89
      %s91 = sshll.u32 %s3, 4
      %s92 = int_to_ptr.hbm [resolvable:$true] %s91
      %94 = dma.vmem_to_hbm [thread:$0]  %s90, 128, %s92, [#allocation4]
    $region25: #{tpu_custom_call.1} parent=1 // pred_fallthru
      _
    // Predicated region
    $region26: #{tpu_custom_call.1} parent=1 // pred_check
      _
    $region27: #{tpu_custom_call.1} parent=1 // pred_check_branch
      %96 = sbr.rel (0) target = $region29
    $region28: #{tpu_custom_call.1} parent=1 // pred_region
      %98 = dma.done [#allocation4], 128
    $region29: #{tpu_custom_call.1} parent=1 // pred_fallthru
      _
    %99 = vsyncpa [#allocation3], 1
    %100 = vsyncpa [#allocation6], 1
    %101 = vsyncpa [#allocation4], 1

</llo_original>
